<compile_context>
chip_gen: v5e
topology: v5e:2x2
jax: 0.10.0
libtpu: 0.0.40
codegen_flags: <defaults>
</compile_context>

<pallas_src>
import functools

import jax
import jax.numpy as jnp
from jax import lax
from jax.experimental import pallas as pl
from jax.experimental.pallas import tpu as pltpu

LN_EPS = 1e-5        # PyTorch nn.LayerNorm default
NEG_MASK = -1e30     # finite sentinel (avoids inf-inf -> NaN hazards)


def transformer_block_kernel(x_ref, g1_ref, b1_ref, wqkv_ref, wo_ref, bo_ref,
                             g2_ref, b2_ref, w1_ref, bb1_ref, w2_ref, bb2_ref,
                             o_ref, *, num_heads, head_size, causal,
                             mxu_dtype):
    """One grid step = one sequence: x_ref is (T, E)."""
    x = x_ref[...]                                     # (T, E) float32
    T, E = x.shape
    NH, HS = num_heads, head_size

    def mm(a):                                         # MXU-input cast only
        return a.astype(mxu_dtype)

    def layer_norm(v, g, b):                           # f32 VPU path
        mu = jnp.mean(v, axis=-1, keepdims=True)
        var = jnp.mean((v - mu) ** 2, axis=-1, keepdims=True)
        return (v - mu) * lax.rsqrt(var + LN_EPS) * g + b

    # ---------------- attention branch: att(norm1(x)) + x ----------------
    xn = layer_norm(x, g1_ref[...], b1_ref[...])                 # (T, E)

    # head-batched fused QKV projection (weights pre-laid-out as (NH, E, 3HS))
    xb = jnp.broadcast_to(mm(xn), (NH, T, E))
    qkv = jnp.einsum('hte,hef->htf', xb, wqkv_ref[...],
                     preferred_element_type=jnp.float32)         # (NH, T, 3HS)

    scale = 1.0 / (HS ** 0.5)
    q = qkv[:, :, :HS] * scale          # fold softmax scale into q (small)
    k = qkv[:, :, HS:2 * HS]
    v = qkv[:, :, 2 * HS:]

    s = jnp.einsum('hqd,hkd->hqk', mm(q), mm(k),
                   preferred_element_type=jnp.float32)           # (NH, T, T)
    if causal:
        row = lax.broadcasted_iota(jnp.int32, (T, T), 0)
        col = lax.broadcasted_iota(jnp.int32, (T, T), 1)
        s = jnp.where((row >= col)[None, :, :], s, NEG_MASK)

    m = jnp.max(s, axis=-1, keepdims=True)
    p = jnp.exp(s - m)                                           # EUP
    l = jnp.sum(p, axis=-1, keepdims=True)                       # (NH, T, 1)

    att = jnp.einsum('hqk,hkd->hqd', mm(p), mm(v),
                     preferred_element_type=jnp.float32)         # (NH, T, HS)
    # softmax normalization folded AFTER the PV matmul (T*HS elems, not T*T)
    att = att * pl.reciprocal(l, approx=False)

    # per-head output projection + sum over heads == concat-heads @ Wo
    atto = jnp.einsum('htd,hde->hte', mm(att), wo_ref[...],
                      preferred_element_type=jnp.float32)        # (NH, T, E)
    out1 = jnp.sum(atto, axis=0) + bo_ref[...] + x               # residual 1

    # ---------------- MLP branch: relu_layer(norm2(out1)) + out1 ----------
    yn = layer_norm(out1, g2_ref[...], b2_ref[...])
    h1 = jnp.dot(mm(yn), w1_ref[...],
                 preferred_element_type=jnp.float32) + bb1_ref[...]
    h1 = jnp.maximum(h1, 0.0)                                    # ReLU
    h2 = jnp.dot(mm(h1), w2_ref[...],
                 preferred_element_type=jnp.float32) + bb2_ref[...]

    o_ref[...] = (h2 + out1).astype(o_ref.dtype)                 # residual 2


@functools.partial(jax.jit,
                   static_argnames=("num_heads", "head_size", "causal",
                                    "mxu_dtype"))
def transformer_block(x, params, *, num_heads, head_size, causal=True,
                      mxu_dtype=jnp.float32):
    B, T, E = x.shape
    NH, HS = num_heads, head_size
    NHH = NH * HS
    P = params["w1"].shape[1]

    # -------- wrapper-side weight re-layout (plain XLA, done once) --------
    def per_head_in(w):                        # (E, NH*HS) -> (NH, E, HS)
        return w.reshape(E, NH, HS).transpose(1, 0, 2)

    wqkv_h = jnp.concatenate([per_head_in(params["wq"]),
                              per_head_in(params["wk"]),
                              per_head_in(params["wv"])], axis=-1)  # (NH,E,3HS)
    wo_h = params["wo"].reshape(NH, HS, E)                          # (NH,HS,E)

    wcast = lambda w: w.astype(mxu_dtype)      # bf16 pre-cast halves weight DMA
    plist = [params["g1"], params["b1"],
             wcast(wqkv_h), wcast(wo_h), params["bo"],
             params["g2"], params["b2"],
             wcast(params["w1"]), params["bb1"],
             wcast(params["w2"]), params["bb2"]]

    x2 = x.reshape(B * T, E)                   # one (T, E) block per grid step

    def rep_spec(a):
        nd = a.ndim
        return pl.BlockSpec(a.shape, lambda i, _nd=nd: (0,) * _nd)

    kernel = functools.partial(
        transformer_block_kernel, num_heads=NH, head_size=HS,
        causal=causal, mxu_dtype=mxu_dtype)

    BT = B * T
    flops = 2 * BT * E * 3 * NHH               # fused qkv projection
    flops += 4 * B * NH * T * T * HS           # scores + pv (per sequence!)
    flops += 2 * BT * NHH * E                  # output projection
    flops += 2 * BT * E * P + 2 * BT * P * E   # MLP
    bytes_acc = 2 * x.size * x.dtype.itemsize
    bytes_acc += sum(int(a.size) * a.dtype.itemsize for a in plist) * B
    cost = pl.CostEstimate(
        flops=int(flops),
        transcendentals=int(B * NH * T * T + 2 * BT),
        bytes_accessed=int(bytes_acc))

    out2 = pl.pallas_call(
        kernel,
        out_shape=jax.ShapeDtypeStruct((B * T, E), x.dtype),
        grid=(B,),
        in_specs=[pl.BlockSpec((T, E), lambda i: (i, 0))]
                 + [rep_spec(a) for a in plist],
        out_specs=pl.BlockSpec((T, E), lambda i: (i, 0)),
        compiler_params=pltpu.CompilerParams(
            dimension_semantics=("parallel",)),
        cost_estimate=cost,
    )(x2, *plist)
    return out2.reshape(B, T, E)


def make_params(key, emb, num_heads, head_size, proj):
    nh_h = num_heads * head_size
    ks = jax.random.split(key, 6)

    def init(k, shape, fan_in):
        return jax.random.normal(k, shape, jnp.float32) / jnp.sqrt(fan_in)

    return dict(
        g1=jnp.ones((1, emb), jnp.float32), b1=jnp.zeros((1, emb), jnp.float32),
        wq=init(ks[0], (emb, nh_h), emb),
        wk=init(ks[1], (emb, nh_h), emb),
        wv=init(ks[2], (emb, nh_h), emb),
        wo=init(ks[3], (nh_h, emb), nh_h), bo=jnp.zeros((1, emb), jnp.float32),
        g2=jnp.ones((1, emb), jnp.float32), b2=jnp.zeros((1, emb), jnp.float32),
        w1=init(ks[4], (emb, proj), emb), bb1=jnp.zeros((1, proj), jnp.float32),
        w2=init(ks[5], (proj, emb), proj), bb2=jnp.zeros((1, emb), jnp.float32),
    )


def reference(x, p, num_heads, head_size, causal=True):
    """Pure-JAX reference matching the PyTorch forward (eval mode)."""
    def ln(v, g, b):
        mu = v.mean(-1, keepdims=True)
        var = ((v - mu) ** 2).mean(-1, keepdims=True)
        return (v - mu) / jnp.sqrt(var + LN_EPS) * g + b

    B, T, E = x.shape
    xn = ln(x, p["g1"][0], p["b1"][0])
    q = (xn @ p["wq"]).reshape(B, T, num_heads, head_size).transpose(0, 2, 1, 3)
    k = (xn @ p["wk"]).reshape(B, T, num_heads, head_size).transpose(0, 2, 1, 3)
    v = (xn @ p["wv"]).reshape(B, T, num_heads, head_size).transpose(0, 2, 1, 3)
    s = jnp.einsum("bhqd,bhkd->bhqk", q, k) / jnp.sqrt(float(head_size))
    if causal:
        s = jnp.where(jnp.tril(jnp.ones((T, T), bool)), s, -jnp.inf)
    att = jnp.einsum("bhqk,bhkd->bhqd", jax.nn.softmax(s, axis=-1), v)
    att = att.transpose(0, 2, 1, 3).reshape(B, T, -1) @ p["wo"] + p["bo"][0]
    out1 = att + x
    yn = ln(out1, p["g2"][0], p["b2"][0])
    h = jnp.maximum(yn @ p["w1"] + p["bb1"][0], 0.0)
    return h @ p["w2"] + p["bb2"][0] + out1


if __name__ == "__main__":
    # emb_size=32, num_heads=4 -> head_size=8, proj_size=4*emb=128,
    # block_size=seq=8, batch=2, encoders=False (causal), dropout=None.
    B, T, E = 2, 8, 32
    NH, HS = 4, 8
    PROJ = NH * HS * 4

    key = jax.random.PRNGKey(0)
    kx, kp = jax.random.split(key)
    x = jax.random.normal(kx, (B, T, E), jnp.float32)
    params = make_params(kp, E, NH, HS, PROJ)

    ref = reference(x, params, NH, HS, causal=True)

    # f32 MXU inputs.
    out = transformer_block(x, params, num_heads=NH, head_size=HS, causal=True)
    jax.block_until_ready(out)
    assert out.shape == (B, T, E)
    err = float(jnp.max(jnp.abs(out - ref)))
    assert jnp.allclose(out, ref, atol=2e-2, rtol=2e-2), err

    # bf16-weights / bf16-at-the-MXU variant (recommended on v5e/v6e/v7x);
    # VPU math (LN / softmax / residuals) stays f32.
    out_bf16 = transformer_block(x, params, num_heads=NH, head_size=HS,
                                 causal=True, mxu_dtype=jnp.bfloat16)
    jax.block_until_ready(out_bf16)
    assert bool(jnp.all(jnp.isfinite(out_bf16)))
    assert jnp.allclose(out_bf16, ref, atol=1e-1, rtol=1e-1)

    print("KERNEL_OK")
</pallas_src>

<mosaic_0001>
module attributes {stable_mosaic.version = 11 : i64} {
  func.func @transformer_block_kernel(%arg0: i32, %arg1: memref<8x32xf32, #tpu.memory_space<vmem>>, %arg2: memref<1x32xf32, #tpu.memory_space<vmem>>, %arg3: memref<1x32xf32, #tpu.memory_space<vmem>>, %arg4: memref<4x32x24xf32, #tpu.memory_space<vmem>>, %arg5: memref<4x8x32xf32, #tpu.memory_space<vmem>>, %arg6: memref<1x32xf32, #tpu.memory_space<vmem>>, %arg7: memref<1x32xf32, #tpu.memory_space<vmem>>, %arg8: memref<1x32xf32, #tpu.memory_space<vmem>>, %arg9: memref<32x128xf32, #tpu.memory_space<vmem>>, %arg10: memref<1x128xf32, #tpu.memory_space<vmem>>, %arg11: memref<128x32xf32, #tpu.memory_space<vmem>>, %arg12: memref<1x32xf32, #tpu.memory_space<vmem>>, %arg13: memref<8x32xf32, #tpu.memory_space<vmem>>) attributes {dimension_semantics = [#tpu.dimension_semantics<parallel>], iteration_bounds = array<i64: 2>, scalar_prefetch = 0 : i64, scratch_operands = 0 : i64, tpu.core_type = #tpu.core_type<tc>, window_params = [{transform_indices = @transform_0, window_bounds = array<i64: 8, 32>}, {pipeline_mode = #tpu.pipeline_mode<synchronous>, transform_indices = @transform_1, window_bounds = array<i64: 1, 32>}, {pipeline_mode = #tpu.pipeline_mode<synchronous>, transform_indices = @transform_2, window_bounds = array<i64: 1, 32>}, {pipeline_mode = #tpu.pipeline_mode<synchronous>, transform_indices = @transform_3, window_bounds = array<i64: 4, 32, 24>}, {pipeline_mode = #tpu.pipeline_mode<synchronous>, transform_indices = @transform_4, window_bounds = array<i64: 4, 8, 32>}, {pipeline_mode = #tpu.pipeline_mode<synchronous>, transform_indices = @transform_5, window_bounds = array<i64: 1, 32>}, {pipeline_mode = #tpu.pipeline_mode<synchronous>, transform_indices = @transform_6, window_bounds = array<i64: 1, 32>}, {pipeline_mode = #tpu.pipeline_mode<synchronous>, transform_indices = @transform_7, window_bounds = array<i64: 1, 32>}, {pipeline_mode = #tpu.pipeline_mode<synchronous>, transform_indices = @transform_8, window_bounds = array<i64: 32, 128>}, {pipeline_mode = #tpu.pipeline_mode<synchronous>, transform_indices = @transform_9, window_bounds = array<i64: 1, 128>}, {pipeline_mode = #tpu.pipeline_mode<synchronous>, transform_indices = @transform_10, window_bounds = array<i64: 128, 32>}, {pipeline_mode = #tpu.pipeline_mode<synchronous>, transform_indices = @transform_11, window_bounds = array<i64: 1, 32>}, {transform_indices = @transform_12, window_bounds = array<i64: 8, 32>}]} {
    %c0 = arith.constant 0 : index
    %c0_0 = arith.constant 0 : index
    %0 = vector.load %arg1[%c0, %c0_0] : memref<8x32xf32, #tpu.memory_space<vmem>>, vector<8x32xf32>
    %c0_1 = arith.constant 0 : index
    %c0_2 = arith.constant 0 : index
    %1 = vector.load %arg2[%c0_1, %c0_2] : memref<1x32xf32, #tpu.memory_space<vmem>>, vector<1x32xf32>
    %c0_3 = arith.constant 0 : index
    %c0_4 = arith.constant 0 : index
    %2 = vector.load %arg3[%c0_3, %c0_4] : memref<1x32xf32, #tpu.memory_space<vmem>>, vector<1x32xf32>
    %cst = arith.constant dense<0.000000e+00> : vector<8xf32>
    %3 = vector.multi_reduction <add>, %0, %cst [1] : vector<8x32xf32> to vector<8xf32>
    %4 = vector.shape_cast %3 : vector<8xf32> to vector<8x1xf32>
    %cst_5 = arith.constant 3.200000e+01 : f32
    %5 = vector.broadcast %cst_5 : f32 to vector<8x1xf32>
    %6 = arith.divf %4, %5 : vector<8x1xf32>
    %7 = vector.broadcast %6 : vector<8x1xf32> to vector<8x32xf32>
    %8 = arith.subf %0, %7 : vector<8x32xf32>
    %9 = arith.mulf %8, %8 : vector<8x32xf32>
    %cst_6 = arith.constant dense<0.000000e+00> : vector<8xf32>
    %10 = vector.multi_reduction <add>, %9, %cst_6 [1] : vector<8x32xf32> to vector<8xf32>
    %11 = vector.shape_cast %10 : vector<8xf32> to vector<8x1xf32>
    %cst_7 = arith.constant 3.200000e+01 : f32
    %12 = vector.broadcast %cst_7 : f32 to vector<8x1xf32>
    %13 = arith.divf %11, %12 : vector<8x1xf32>
    %14 = vector.broadcast %6 : vector<8x1xf32> to vector<8x32xf32>
    %15 = arith.subf %0, %14 : vector<8x32xf32>
    %cst_8 = arith.constant 9.99999974E-6 : f32
    %16 = vector.broadcast %cst_8 : f32 to vector<8x1xf32>
    %17 = arith.addf %13, %16 : vector<8x1xf32>
    %18 = math.rsqrt %17 : vector<8x1xf32>
    %19 = vector.broadcast %18 : vector<8x1xf32> to vector<8x32xf32>
    %20 = arith.mulf %15, %19 : vector<8x32xf32>
    %21 = vector.broadcast %1 : vector<1x32xf32> to vector<8x32xf32>
    %22 = arith.mulf %20, %21 : vector<8x32xf32>
    %23 = vector.broadcast %2 : vector<1x32xf32> to vector<8x32xf32>
    %24 = arith.addf %22, %23 : vector<8x32xf32>
    %25 = vector.shape_cast %24 : vector<8x32xf32> to vector<1x8x32xf32>
    %26 = vector.broadcast %25 : vector<1x8x32xf32> to vector<4x8x32xf32>
    %c0_9 = arith.constant 0 : index
    %c0_10 = arith.constant 0 : index
    %c0_11 = arith.constant 0 : index
    %27 = vector.load %arg4[%c0_9, %c0_10, %c0_11] : memref<4x32x24xf32, #tpu.memory_space<vmem>>, vector<4x32x24xf32>
    "tpu.trace_start"() <{level = 10 : i32, message = "hte,hef->htf"}> : () -> ()
    %cst_12 = arith.constant dense<0.000000e+00> : vector<4x8x24xf32>
    %28 = tpu.matmul %26, %27, %cst_12 {dimension_numbers = #tpu.dot_dimension_numbers<[2], [1], [1], [2], [0, 0, 0, 1, 1, 2], [0], [0]>} : vector<4x8x32xf32>, vector<4x32x24xf32>, vector<4x8x24xf32> -> vector<4x8x24xf32>
    "tpu.trace_stop"() : () -> ()
    %29 = vector.extract_strided_slice %28 {offsets = [0, 0, 0], sizes = [4, 8, 8], strides = [1, 1, 1]} : vector<4x8x24xf32> to vector<4x8x8xf32>
    %cst_13 = arith.constant 0.353553385 : f32
    %30 = vector.broadcast %cst_13 : f32 to vector<4x8x8xf32>
    %31 = arith.mulf %29, %30 : vector<4x8x8xf32>
    %32 = vector.extract_strided_slice %28 {offsets = [0, 0, 8], sizes = [4, 8, 8], strides = [1, 1, 1]} : vector<4x8x24xf32> to vector<4x8x8xf32>
    %33 = vector.extract_strided_slice %28 {offsets = [0, 0, 16], sizes = [4, 8, 8], strides = [1, 1, 1]} : vector<4x8x24xf32> to vector<4x8x8xf32>
    "tpu.trace_start"() <{level = 10 : i32, message = "hqd,hkd->hqk"}> : () -> ()
    %cst_14 = arith.constant dense<0.000000e+00> : vector<4x8x8xf32>
    %34 = tpu.matmul %31, %32, %cst_14 {dimension_numbers = #tpu.dot_dimension_numbers<[2], [2], [1], [1], [0, 0, 0, 1, 1, 1], [0], [0]>} : vector<4x8x8xf32>, vector<4x8x8xf32>, vector<4x8x8xf32> -> vector<4x8x8xf32>
    "tpu.trace_stop"() : () -> ()
    %35 = tpu.iota {dimensions = array<i32: 0>} : vector<8x8xi32>
    %36 = tpu.iota {dimensions = array<i32: 1>} : vector<8x8xi32>
    %37 = arith.cmpi sge, %35, %36 : vector<8x8xi32>
    %38 = vector.shape_cast %37 : vector<8x8xi1> to vector<1x8x8xi1>
    %cst_15 = arith.constant -1.000000e+30 : f32
    %39 = vector.shape_cast %38 : vector<1x8x8xi1> to vector<1x8x8xi1>
    %40 = vector.broadcast %39 : vector<1x8x8xi1> to vector<4x8x8xi1>
    %41 = vector.broadcast %cst_15 : f32 to vector<4x8x8xf32>
    %42 = arith.select %40, %34, %41 : vector<4x8x8xi1>, vector<4x8x8xf32>
    %cst_16 = arith.constant dense<0xFF800000> : vector<4x8xf32>
    %43 = vector.multi_reduction <maximumf>, %42, %cst_16 [2] : vector<4x8x8xf32> to vector<4x8xf32>
    %44 = vector.shape_cast %43 : vector<4x8xf32> to vector<4x8x1xf32>
    %45 = vector.broadcast %44 : vector<4x8x1xf32> to vector<4x8x8xf32>
    %46 = arith.subf %42, %45 : vector<4x8x8xf32>
    %47 = math.exp %46 : vector<4x8x8xf32>
    %cst_17 = arith.constant dense<0.000000e+00> : vector<4x8xf32>
    %48 = vector.multi_reduction <add>, %47, %cst_17 [2] : vector<4x8x8xf32> to vector<4x8xf32>
    %49 = vector.shape_cast %48 : vector<4x8xf32> to vector<4x8x1xf32>
    "tpu.trace_start"() <{level = 10 : i32, message = "hqk,hkd->hqd"}> : () -> ()
    %cst_18 = arith.constant dense<0.000000e+00> : vector<4x8x8xf32>
    %50 = tpu.matmul %47, %33, %cst_18 {dimension_numbers = #tpu.dot_dimension_numbers<[2], [1], [1], [2], [0, 0, 0, 1, 1, 2], [0], [0]>} : vector<4x8x8xf32>, vector<4x8x8xf32>, vector<4x8x8xf32> -> vector<4x8x8xf32>
    "tpu.trace_stop"() : () -> ()
    %51 = tpu.reciprocal %49 : vector<4x8x1xf32> -> vector<4x8x1xf32>
    %52 = vector.broadcast %51 : vector<4x8x1xf32> to vector<4x8x8xf32>
    %53 = arith.mulf %50, %52 : vector<4x8x8xf32>
    %c0_19 = arith.constant 0 : index
    %c0_20 = arith.constant 0 : index
    %c0_21 = arith.constant 0 : index
    %54 = vector.load %arg5[%c0_19, %c0_20, %c0_21] : memref<4x8x32xf32, #tpu.memory_space<vmem>>, vector<4x8x32xf32>
    "tpu.trace_start"() <{level = 10 : i32, message = "htd,hde->hte"}> : () -> ()
    %cst_22 = arith.constant dense<0.000000e+00> : vector<4x8x32xf32>
    %55 = tpu.matmul %53, %54, %cst_22 {dimension_numbers = #tpu.dot_dimension_numbers<[2], [1], [1], [2], [0, 0, 0, 1, 1, 2], [0], [0]>} : vector<4x8x8xf32>, vector<4x8x32xf32>, vector<4x8x32xf32> -> vector<4x8x32xf32>
    "tpu.trace_stop"() : () -> ()
    %cst_23 = arith.constant dense<0.000000e+00> : vector<8x32xf32>
    %56 = vector.multi_reduction <add>, %55, %cst_23 [0] : vector<4x8x32xf32> to vector<8x32xf32>
    %c0_24 = arith.constant 0 : index
    %c0_25 = arith.constant 0 : index
    %57 = vector.load %arg6[%c0_24, %c0_25] : memref<1x32xf32, #tpu.memory_space<vmem>>, vector<1x32xf32>
    %58 = vector.broadcast %57 : vector<1x32xf32> to vector<8x32xf32>
    %59 = arith.addf %56, %58 : vector<8x32xf32>
    %60 = arith.addf %59, %0 : vector<8x32xf32>
    %c0_26 = arith.constant 0 : index
    %c0_27 = arith.constant 0 : index
    %61 = vector.load %arg7[%c0_26, %c0_27] : memref<1x32xf32, #tpu.memory_space<vmem>>, vector<1x32xf32>
    %c0_28 = arith.constant 0 : index
    %c0_29 = arith.constant 0 : index
    %62 = vector.load %arg8[%c0_28, %c0_29] : memref<1x32xf32, #tpu.memory_space<vmem>>, vector<1x32xf32>
    %cst_30 = arith.constant dense<0.000000e+00> : vector<8xf32>
    %63 = vector.multi_reduction <add>, %60, %cst_30 [1] : vector<8x32xf32> to vector<8xf32>
    %64 = vector.shape_cast %63 : vector<8xf32> to vector<8x1xf32>
    %cst_31 = arith.constant 3.200000e+01 : f32
    %65 = vector.broadcast %cst_31 : f32 to vector<8x1xf32>
    %66 = arith.divf %64, %65 : vector<8x1xf32>
    %67 = vector.broadcast %66 : vector<8x1xf32> to vector<8x32xf32>
    %68 = arith.subf %60, %67 : vector<8x32xf32>
    %69 = arith.mulf %68, %68 : vector<8x32xf32>
    %cst_32 = arith.constant dense<0.000000e+00> : vector<8xf32>
    %70 = vector.multi_reduction <add>, %69, %cst_32 [1] : vector<8x32xf32> to vector<8xf32>
    %71 = vector.shape_cast %70 : vector<8xf32> to vector<8x1xf32>
    %cst_33 = arith.constant 3.200000e+01 : f32
    %72 = vector.broadcast %cst_33 : f32 to vector<8x1xf32>
    %73 = arith.divf %71, %72 : vector<8x1xf32>
    %74 = vector.broadcast %66 : vector<8x1xf32> to vector<8x32xf32>
    %75 = arith.subf %60, %74 : vector<8x32xf32>
    %cst_34 = arith.constant 9.99999974E-6 : f32
    %76 = vector.broadcast %cst_34 : f32 to vector<8x1xf32>
    %77 = arith.addf %73, %76 : vector<8x1xf32>
    %78 = math.rsqrt %77 : vector<8x1xf32>
    %79 = vector.broadcast %78 : vector<8x1xf32> to vector<8x32xf32>
    %80 = arith.mulf %75, %79 : vector<8x32xf32>
    %81 = vector.broadcast %61 : vector<1x32xf32> to vector<8x32xf32>
    %82 = arith.mulf %80, %81 : vector<8x32xf32>
    %83 = vector.broadcast %62 : vector<1x32xf32> to vector<8x32xf32>
    %84 = arith.addf %82, %83 : vector<8x32xf32>
    %c0_35 = arith.constant 0 : index
    %c0_36 = arith.constant 0 : index
    %85 = vector.load %arg9[%c0_35, %c0_36] : memref<32x128xf32, #tpu.memory_space<vmem>>, vector<32x128xf32>
    %cst_37 = arith.constant dense<0.000000e+00> : vector<8x128xf32>
    %86 = tpu.matmul %84, %85, %cst_37 {dimension_numbers = #tpu.dot_dimension_numbers<[1], [0], [0], [1], [0, 0, 1, 1], [], []>} : vector<8x32xf32>, vector<32x128xf32>, vector<8x128xf32> -> vector<8x128xf32>
    %c0_38 = arith.constant 0 : index
    %c0_39 = arith.constant 0 : index
    %87 = vector.load %arg10[%c0_38, %c0_39] : memref<1x128xf32, #tpu.memory_space<vmem>>, vector<1x128xf32>
    %88 = vector.broadcast %87 : vector<1x128xf32> to vector<8x128xf32>
    %89 = arith.addf %86, %88 : vector<8x128xf32>
    %cst_40 = arith.constant 0.000000e+00 : f32
    %90 = vector.broadcast %cst_40 : f32 to vector<8x128xf32>
    %91 = arith.maximumf %89, %90 : vector<8x128xf32>
    %c0_41 = arith.constant 0 : index
    %c0_42 = arith.constant 0 : index
    %92 = vector.load %arg11[%c0_41, %c0_42] : memref<128x32xf32, #tpu.memory_space<vmem>>, vector<128x32xf32>
    %cst_43 = arith.constant dense<0.000000e+00> : vector<8x32xf32>
    %93 = tpu.matmul %91, %92, %cst_43 {dimension_numbers = #tpu.dot_dimension_numbers<[1], [0], [0], [1], [0, 0, 1, 1], [], []>} : vector<8x128xf32>, vector<128x32xf32>, vector<8x32xf32> -> vector<8x32xf32>
    %c0_44 = arith.constant 0 : index
    %c0_45 = arith.constant 0 : index
    %94 = vector.load %arg12[%c0_44, %c0_45] : memref<1x32xf32, #tpu.memory_space<vmem>>, vector<1x32xf32>
    %95 = vector.broadcast %94 : vector<1x32xf32> to vector<8x32xf32>
    %96 = arith.addf %93, %95 : vector<8x32xf32>
    %97 = arith.addf %96, %60 : vector<8x32xf32>
    %c0_46 = arith.constant 0 : index
    %c0_47 = arith.constant 0 : index
    %98 = vector.load %arg13[%c0_46, %c0_47] : memref<8x32xf32, #tpu.memory_space<vmem>>, vector<8x32xf32>
    tpu.vector_store %arg13[%c0_46, %c0_47], %97 {strides = array<i32>} : memref<8x32xf32, #tpu.memory_space<vmem>>, vector<8x32xf32>,
    return
  }
  func.func @transform_0(%arg0: i32) -> (i32, i32) {
    %c0_i32 = arith.constant 0 : i32
    %c0_i32_0 = arith.constant 0 : i32
    return %arg0, %c0_i32 : i32, i32
  }
  func.func @transform_1(%arg0: i32) -> (i32, i32) {
    %c0_i32 = arith.constant 0 : i32
    %c0_i32_0 = arith.constant 0 : i32
    %c0_i32_1 = arith.constant 0 : i32
    return %c0_i32, %c0_i32_0 : i32, i32
  }
  func.func @transform_2(%arg0: i32) -> (i32, i32) {
    %c0_i32 = arith.constant 0 : i32
    %c0_i32_0 = arith.constant 0 : i32
    %c0_i32_1 = arith.constant 0 : i32
    return %c0_i32, %c0_i32_0 : i32, i32
  }
  func.func @transform_3(%arg0: i32) -> (i32, i32, i32) {
    %c0_i32 = arith.constant 0 : i32
    %c0_i32_0 = arith.constant 0 : i32
    %c0_i32_1 = arith.constant 0 : i32
    %c0_i32_2 = arith.constant 0 : i32
    return %c0_i32, %c0_i32_0, %c0_i32_1 : i32, i32, i32
  }
  func.func @transform_4(%arg0: i32) -> (i32, i32, i32) {
    %c0_i32 = arith.constant 0 : i32
    %c0_i32_0 = arith.constant 0 : i32
    %c0_i32_1 = arith.constant 0 : i32
    %c0_i32_2 = arith.constant 0 : i32
    return %c0_i32, %c0_i32_0, %c0_i32_1 : i32, i32, i32
  }
  func.func @transform_5(%arg0: i32) -> (i32, i32) {
    %c0_i32 = arith.constant 0 : i32
    %c0_i32_0 = arith.constant 0 : i32
    %c0_i32_1 = arith.constant 0 : i32
    return %c0_i32, %c0_i32_0 : i32, i32
  }
  func.func @transform_6(%arg0: i32) -> (i32, i32) {
    %c0_i32 = arith.constant 0 : i32
    %c0_i32_0 = arith.constant 0 : i32
    %c0_i32_1 = arith.constant 0 : i32
    return %c0_i32, %c0_i32_0 : i32, i32
  }
  func.func @transform_7(%arg0: i32) -> (i32, i32) {
    %c0_i32 = arith.constant 0 : i32
    %c0_i32_0 = arith.constant 0 : i32
    %c0_i32_1 = arith.constant 0 : i32
    return %c0_i32, %c0_i32_0 : i32, i32
  }
  func.func @transform_8(%arg0: i32) -> (i32, i32) {
    %c0_i32 = arith.constant 0 : i32
    %c0_i32_0 = arith.constant 0 : i32
    %c0_i32_1 = arith.constant 0 : i32
    return %c0_i32, %c0_i32_0 : i32, i32
  }
  func.func @transform_9(%arg0: i32) -> (i32, i32) {
    %c0_i32 = arith.constant 0 : i32
    %c0_i32_0 = arith.constant 0 : i32
    %c0_i32_1 = arith.constant 0 : i32
    return %c0_i32, %c0_i32_0 : i32, i32
  }
  func.func @transform_10(%arg0: i32) -> (i32, i32) {
    %c0_i32 = arith.constant 0 : i32
    %c0_i32_0 = arith.constant 0 : i32
    %c0_i32_1 = arith.constant 0 : i32
    return %c0_i32, %c0_i32_0 : i32, i32
  }
  func.func @transform_11(%arg0: i32) -> (i32, i32) {
    %c0_i32 = arith.constant 0 : i32
    %c0_i32_0 = arith.constant 0 : i32
    %c0_i32_1 = arith.constant 0 : i32
    return %c0_i32, %c0_i32_0 : i32, i32
  }
  func.func @transform_12(%arg0: i32) -> (i32, i32) {
    %c0_i32 = arith.constant 0 : i32
    %c0_i32_0 = arith.constant 0 : i32
    return %arg0, %c0_i32 : i32, i32
  }
}

</mosaic_0001>

<llo_original>
// kernel: transformer_block.1
$region0: #{transformer_block.1}
  #allocation0 [shape = 'u32[]', space=smem, size = 0x4, offset = 0x4, fixed_abs, tag = 'smem constant byte address 0x4 - core index']
  #allocation1 [shape = 'u32[72,128]{1,0:T(1,128)}', space=vmem, size = 0x9000, scoped, tag = 'internal scratch']
  %s0 = inlined_call_operand.vmem [shape: f32[16,32], index: 0, kind: input, shape index: {}]
  %s1 = inlined_call_operand.vmem [shape: f32[1,32], index: 1, kind: input, shape index: {}]
  %s2 = inlined_call_operand.vmem [shape: f32[1,32], index: 2, kind: input, shape index: {}]
  %s3 = inlined_call_operand.vmem [shape: f32[4,32,24], index: 3, kind: input, shape index: {}]
  %s4 = inlined_call_operand.vmem [shape: f32[4,8,32], index: 4, kind: input, shape index: {}]
  %s5 = inlined_call_operand.vmem [shape: f32[1,32], index: 5, kind: input, shape index: {}]
  %s6 = inlined_call_operand.vmem [shape: f32[1,32], index: 6, kind: input, shape index: {}]
  %s7 = inlined_call_operand.vmem [shape: f32[1,32], index: 7, kind: input, shape index: {}]
  %s8 = inlined_call_operand.vmem [shape: f32[32,128], index: 8, kind: input, shape index: {}]
  %s9 = inlined_call_operand.vmem [shape: f32[1,128], index: 9, kind: input, shape index: {}]
  %s10 = inlined_call_operand.vmem [shape: f32[128,32], index: 10, kind: input, shape index: {}]
  %s11 = inlined_call_operand.vmem [shape: f32[1,32], index: 11, kind: input, shape index: {}]
  %s12 = inlined_call_operand.hbm [shape: f32[16,32], index: 12, kind: output, shape index: {}]
  %s13 = sld [smem:[#allocation0]]
  $region81: #{transformer_block.1} parent=0
    _
  %s15 = ssub.s32 1, %s13
  %s16 = scalar_select 0, %s15, %s13
  $region1: #{transformer_block.1} parent=0
    #allocation2 [shape = 'u8[8192]{0}', space=vmem, size = 0x2000, scoped, tag = 'output window, operand 0']
    #allocation3 [shape = 's32[2]{0}', space=sflag, size = 0x8, scoped, tag = 'scoped memory for transformer_block.1']
    %17 = vsyncpa [#allocation3], 0
    %s18 = scalar_lea.sflag [#allocation3], 1
    %19 = vsyncpa %s18, 0
    loop: start=0, step=1, limit=4
    $region2: #{transformer_block.1} parent=1 // loop_pre_header
      _
    $region3: #{transformer_block.1} parent=1 // loop_header
      %s21 = sphi 0, %s25
      %p22 = scmp.ge.s32.totalorder %s21, 4
      %s31 = sphi 0, %s33
      %s34 = sphi 0, %s31
      %s35 = sphi 0, %s34
      %s51 = sphi 0, %s35
      %s55 = sphi 0, %s55
      %s57 = sphi 0, %s55
      %s58 = sphi 0, %s57
      %s72 = sphi 0, %s58
      %s76 = sphi 0, %s76
      %s78 = sphi 0, %s76
      %s79 = sphi 0, %s78
      %s93 = sphi 0, %s79
      %s97 = sphi 0, %s97
      %s99 = sphi 0, %s97
      %s100 = sphi 0, %s99
      %s114 = sphi 0, %s100
      %s118 = sphi 0, %s118
      %s120 = sphi 0, %s118
      %s121 = sphi 0, %s120
      %s135 = sphi 0, %s121
      %s139 = sphi 0, %s139
      %s141 = sphi 0, %s139
      %s142 = sphi 0, %s141
      %s156 = sphi 0, %s142
      %s160 = sphi 0, %s160
      %s162 = sphi 0, %s160
      %s163 = sphi 0, %s162
      %s177 = sphi 0, %s163
      %s181 = sphi 0, %s181
      %s183 = sphi 0, %s181
      %s184 = sphi 0, %s183
      %s198 = sphi 0, %s184
      %s202 = sphi 0, %s202
      %s204 = sphi 0, %s202
      %s205 = sphi 0, %s204
      %s219 = sphi 0, %s205
      %s223 = sphi 0, %s223
      %s225 = sphi 0, %s223
      %s226 = sphi 0, %s225
      %s240 = sphi 0, %s226
      %s244 = sphi 0, %s244
      %s246 = sphi 0, %s244
      %s247 = sphi 0, %s246
      %s261 = sphi 0, %s247
      %s265 = sphi 0, %s265
      %s267 = sphi 0, %s265
      %s268 = sphi 0, %s267
      %s282 = sphi 0, %s268
      %s288 = sphi 0, %s290
      %s291 = sphi 0, %s288
      %s292 = sphi 0, %s291
      %s308 = sphi 0, %s292
    $region4: #{transformer_block.1} parent=1 // loop_header_branch
      %24 = sbr.rel (%p22) target = $region8
    $region5: #{transformer_block.1} parent=1 // loop_body
      %s26 = ssub.s32 %s21, 1
      %s27 = ssub.s32 %s21, 2
      %s28 = sadd.s32 %s21, 1
      %s29 = ssub.s32 %s21, %s28
      %p30 = scmp.eq.s32.totalorder %s29, 0
      %s32 = sadd.s32 %s31, 1
      %s33 = scalar_select %p30, %s31, %s32
      %p36 = pneg %p30
      %p37 = scmp.eq.s32.totalorder %s21, 1
      %p38 = por %p36, %p37
      %p39 = scmp.ne.s32.totalorder %s31, %s34
      %p40 = scmp.eq.s32.totalorder %s21, 0
      %p41 = por %p39, %p40
      %p42 = scmp.ne.s32.totalorder %s31, %s34
      %p43 = scmp.eq.s32.totalorder %s26, 1
      %p44 = por %p42, %p43
      %p45 = scmp.ne.s32.totalorder %s34, %s35
      %p46 = scmp.eq.s32.totalorder %s26, 0
      %p47 = por %p45, %p46
      %p48 = scmp.ne.s32.totalorder %s34, %s35
      %p49 = scmp.eq.s32.totalorder %s27, 1
      %p50 = por %p48, %p49
      %p52 = scmp.ne.s32.totalorder %s35, %s51
      %p53 = scmp.eq.s32.totalorder %s27, 0
      %p54 = por %p52, %p53
      %s56 = sadd.s32 %s55, 1
      %p59 = scmp.eq.s32.totalorder %s21, 1
      %p60 = scmp.ne.s32.totalorder %s55, %s57
      %p61 = scmp.eq.s32.totalorder %s21, 0
      %p62 = por %p60, %p61
      %p63 = scmp.ne.s32.totalorder %s55, %s57
      %p64 = scmp.eq.s32.totalorder %s26, 1
      %p65 = por %p63, %p64
      %p66 = scmp.ne.s32.totalorder %s57, %s58
      %p67 = scmp.eq.s32.totalorder %s26, 0
      %p68 = por %p66, %p67
      %p69 = scmp.ne.s32.totalorder %s57, %s58
      %p70 = scmp.eq.s32.totalorder %s27, 1
      %p71 = por %p69, %p70
      %p73 = scmp.ne.s32.totalorder %s58, %s72
      %p74 = scmp.eq.s32.totalorder %s27, 0
      %p75 = por %p73, %p74
      %s77 = sadd.s32 %s76, 1
      %p80 = scmp.eq.s32.totalorder %s21, 1
      %p81 = scmp.ne.s32.totalorder %s76, %s78
      %p82 = scmp.eq.s32.totalorder %s21, 0
      %p83 = por %p81, %p82
      %p84 = scmp.ne.s32.totalorder %s76, %s78
      %p85 = scmp.eq.s32.totalorder %s26, 1
      %p86 = por %p84, %p85
      %p87 = scmp.ne.s32.totalorder %s78, %s79
      %p88 = scmp.eq.s32.totalorder %s26, 0
      %p89 = por %p87, %p88
      %p90 = scmp.ne.s32.totalorder %s78, %s79
      %p91 = scmp.eq.s32.totalorder %s27, 1
      %p92 = por %p90, %p91
      %p94 = scmp.ne.s32.totalorder %s79, %s93
      %p95 = scmp.eq.s32.totalorder %s27, 0
      %p96 = por %p94, %p95
      %s98 = sadd.s32 %s97, 1
      %p101 = scmp.eq.s32.totalorder %s21, 1
      %p102 = scmp.ne.s32.totalorder %s97, %s99
      %p103 = scmp.eq.s32.totalorder %s21, 0
      %p104 = por %p102, %p103
      %p105 = scmp.ne.s32.totalorder %s97, %s99
      %p106 = scmp.eq.s32.totalorder %s26, 1
      %p107 = por %p105, %p106
      %p108 = scmp.ne.s32.totalorder %s99, %s100
      %p109 = scmp.eq.s32.totalorder %s26, 0
      %p110 = por %p108, %p109
      %p111 = scmp.ne.s32.totalorder %s99, %s100
      %p112 = scmp.eq.s32.totalorder %s27, 1
      %p113 = por %p111, %p112
      %p115 = scmp.ne.s32.totalorder %s100, %s114
      %p116 = scmp.eq.s32.totalorder %s27, 0
      %p117 = por %p115, %p116
      %s119 = sadd.s32 %s118, 1
      %p122 = scmp.eq.s32.totalorder %s21, 1
      %p123 = scmp.ne.s32.totalorder %s118, %s120
      %p124 = scmp.eq.s32.totalorder %s21, 0
      %p125 = por %p123, %p124
      %p126 = scmp.ne.s32.totalorder %s118, %s120
      %p127 = scmp.eq.s32.totalorder %s26, 1
      %p128 = por %p126, %p127
      %p129 = scmp.ne.s32.totalorder %s120, %s121
      %p130 = scmp.eq.s32.totalorder %s26, 0
      %p131 = por %p129, %p130
      %p132 = scmp.ne.s32.totalorder %s120, %s121
      %p133 = scmp.eq.s32.totalorder %s27, 1
      %p134 = por %p132, %p133
      %p136 = scmp.ne.s32.totalorder %s121, %s135
      %p137 = scmp.eq.s32.totalorder %s27, 0
      %p138 = por %p136, %p137
      %s140 = sadd.s32 %s139, 1
      %p143 = scmp.eq.s32.totalorder %s21, 1
      %p144 = scmp.ne.s32.totalorder %s139, %s141
      %p145 = scmp.eq.s32.totalorder %s21, 0
      %p146 = por %p144, %p145
      %p147 = scmp.ne.s32.totalorder %s139, %s141
      %p148 = scmp.eq.s32.totalorder %s26, 1
      %p149 = por %p147, %p148
      %p150 = scmp.ne.s32.totalorder %s141, %s142
      %p151 = scmp.eq.s32.totalorder %s26, 0
      %p152 = por %p150, %p151
      %p153 = scmp.ne.s32.totalorder %s141, %s142
      %p154 = scmp.eq.s32.totalorder %s27, 1
      %p155 = por %p153, %p154
      %p157 = scmp.ne.s32.totalorder %s142, %s156
      %p158 = scmp.eq.s32.totalorder %s27, 0
      %p159 = por %p157, %p158
      %s161 = sadd.s32 %s160, 1
      %p164 = scmp.eq.s32.totalorder %s21, 1
      %p165 = scmp.ne.s32.totalorder %s160, %s162
      %p166 = scmp.eq.s32.totalorder %s21, 0
      %p167 = por %p165, %p166
      %p168 = scmp.ne.s32.totalorder %s160, %s162
      %p169 = scmp.eq.s32.totalorder %s26, 1
      %p170 = por %p168, %p169
      %p171 = scmp.ne.s32.totalorder %s162, %s163
      %p172 = scmp.eq.s32.totalorder %s26, 0
      %p173 = por %p171, %p172
      %p174 = scmp.ne.s32.totalorder %s162, %s163
      %p175 = scmp.eq.s32.totalorder %s27, 1
      %p176 = por %p174, %p175
      %p178 = scmp.ne.s32.totalorder %s163, %s177
      %p179 = scmp.eq.s32.totalorder %s27, 0
      %p180 = por %p178, %p179
      %s182 = sadd.s32 %s181, 1
      %p185 = scmp.eq.s32.totalorder %s21, 1
      %p186 = scmp.ne.s32.totalorder %s181, %s183
      %p187 = scmp.eq.s32.totalorder %s21, 0
      %p188 = por %p186, %p187
      %p189 = scmp.ne.s32.totalorder %s181, %s183
      %p190 = scmp.eq.s32.totalorder %s26, 1
      %p191 = por %p189, %p190
      %p192 = scmp.ne.s32.totalorder %s183, %s184
      %p193 = scmp.eq.s32.totalorder %s26, 0
      %p194 = por %p192, %p193
      %p195 = scmp.ne.s32.totalorder %s183, %s184
      %p196 = scmp.eq.s32.totalorder %s27, 1
      %p197 = por %p195, %p196
      %p199 = scmp.ne.s32.totalorder %s184, %s198
      %p200 = scmp.eq.s32.totalorder %s27, 0
      %p201 = por %p199, %p200
      %s203 = sadd.s32 %s202, 1
      %p206 = scmp.eq.s32.totalorder %s21, 1
      %p207 = scmp.ne.s32.totalorder %s202, %s204
      %p208 = scmp.eq.s32.totalorder %s21, 0
      %p209 = por %p207, %p208
      %p210 = scmp.ne.s32.totalorder %s202, %s204
      %p211 = scmp.eq.s32.totalorder %s26, 1
      %p212 = por %p210, %p211
      %p213 = scmp.ne.s32.totalorder %s204, %s205
      %p214 = scmp.eq.s32.totalorder %s26, 0
      %p215 = por %p213, %p214
      %p216 = scmp.ne.s32.totalorder %s204, %s205
      %p217 = scmp.eq.s32.totalorder %s27, 1
      %p218 = por %p216, %p217
      %p220 = scmp.ne.s32.totalorder %s205, %s219
      %p221 = scmp.eq.s32.totalorder %s27, 0
      %p222 = por %p220, %p221
      %s224 = sadd.s32 %s223, 1
      %p227 = scmp.eq.s32.totalorder %s21, 1
      %p228 = scmp.ne.s32.totalorder %s223, %s225
      %p229 = scmp.eq.s32.totalorder %s21, 0
      %p230 = por %p228, %p229
      %p231 = scmp.ne.s32.totalorder %s223, %s225
      %p232 = scmp.eq.s32.totalorder %s26, 1
      %p233 = por %p231, %p232
      %p234 = scmp.ne.s32.totalorder %s225, %s226
      %p235 = scmp.eq.s32.totalorder %s26, 0
      %p236 = por %p234, %p235
      %p237 = scmp.ne.s32.totalorder %s225, %s226
      %p238 = scmp.eq.s32.totalorder %s27, 1
      %p239 = por %p237, %p238
      %p241 = scmp.ne.s32.totalorder %s226, %s240
      %p242 = scmp.eq.s32.totalorder %s27, 0
      %p243 = por %p241, %p242
      %s245 = sadd.s32 %s244, 1
      %p248 = scmp.eq.s32.totalorder %s21, 1
      %p249 = scmp.ne.s32.totalorder %s244, %s246
      %p250 = scmp.eq.s32.totalorder %s21, 0
      %p251 = por %p249, %p250
      %p252 = scmp.ne.s32.totalorder %s244, %s246
      %p253 = scmp.eq.s32.totalorder %s26, 1
      %p254 = por %p252, %p253
      %p255 = scmp.ne.s32.totalorder %s246, %s247
      %p256 = scmp.eq.s32.totalorder %s26, 0
      %p257 = por %p255, %p256
      %p258 = scmp.ne.s32.totalorder %s246, %s247
      %p259 = scmp.eq.s32.totalorder %s27, 1
      %p260 = por %p258, %p259
      %p262 = scmp.ne.s32.totalorder %s247, %s261
      %p263 = scmp.eq.s32.totalorder %s27, 0
      %p264 = por %p262, %p263
      %s266 = sadd.s32 %s265, 1
      %p269 = scmp.eq.s32.totalorder %s21, 1
      %p270 = scmp.ne.s32.totalorder %s265, %s267
      %p271 = scmp.eq.s32.totalorder %s21, 0
      %p272 = por %p270, %p271
      %p273 = scmp.ne.s32.totalorder %s265, %s267
      %p274 = scmp.eq.s32.totalorder %s26, 1
      %p275 = por %p273, %p274
      %p276 = scmp.ne.s32.totalorder %s267, %s268
      %p277 = scmp.eq.s32.totalorder %s26, 0
      %p278 = por %p276, %p277
      %p279 = scmp.ne.s32.totalorder %s267, %s268
      %p280 = scmp.eq.s32.totalorder %s27, 1
      %p281 = por %p279, %p280
      %p283 = scmp.ne.s32.totalorder %s268, %s282
      %p284 = scmp.eq.s32.totalorder %s27, 0
      %p285 = por %p283, %p284
      %s286 = ssub.s32 %s21, %s28
      %p287 = scmp.eq.s32.totalorder %s286, 0
      %s289 = sadd.s32 %s288, 1
      %s290 = scalar_select %p287, %s288, %s289
      %p293 = pneg %p287
      %p294 = scmp.eq.s32.totalorder %s21, 1
      %p295 = por %p293, %p294
      %p296 = scmp.ne.s32.totalorder %s288, %s291
      %p297 = scmp.eq.s32.totalorder %s21, 0
      %p298 = por %p296, %p297
      %p299 = scmp.ne.s32.totalorder %s288, %s291
      %p300 = scmp.eq.s32.totalorder %s26, 1
      %p301 = por %p299, %p300
      %p302 = scmp.ne.s32.totalorder %s291, %s292
      %p303 = scmp.eq.s32.totalorder %s26, 0
      %p304 = por %p302, %p303
      %p305 = scmp.ne.s32.totalorder %s291, %s292
      %p306 = scmp.eq.s32.totalorder %s27, 1
      %p307 = por %p305, %p306
      %p309 = scmp.ne.s32.totalorder %s292, %s308
      %p310 = scmp.eq.s32.totalorder %s27, 0
      %p311 = por %p309, %p310
      %p312 = scmp.le.s32.totalorder 1, %s21
      %p313 = scmp.lt.s32.totalorder %s21, 3
      %p314 = pnand %p312, %p313
      %p315 = pneg %p314
      // Predicated region
      $region9: #{transformer_block.1} parent=5 // pred_check
        _
      $region10: #{transformer_block.1} parent=5 // pred_check_branch
        %317 = sbr.rel (%p314) target = $region12
      $region11: #{transformer_block.1} parent=5 // pred_region
        %s318 = ssub.s32 %s21, 1
        // Predicated region
        $region13: #{transformer_block.1} parent=11 // pred_check
          %p319 = pneg %p68
        $region14: #{transformer_block.1} parent=11 // pred_check_branch
          %321 = sbr.rel (%p319) target = $region16
        $region15: #{transformer_block.1} parent=11 // pred_region
          _
        $region16: #{transformer_block.1} parent=11 // pred_fallthru
          _
        // Predicated region
        $region17: #{transformer_block.1} parent=11 // pred_check
          %p322 = pneg %p89
        $region18: #{transformer_block.1} parent=11 // pred_check_branch
          %324 = sbr.rel (%p322) target = $region20
        $region19: #{transformer_block.1} parent=11 // pred_region
          _
        $region20: #{transformer_block.1} parent=11 // pred_fallthru
          _
        // Predicated region
        $region21: #{transformer_block.1} parent=11 // pred_check
          %p325 = pneg %p110
        $region22: #{transformer_block.1} parent=11 // pred_check_branch
          %327 = sbr.rel (%p325) target = $region24
        $region23: #{transformer_block.1} parent=11 // pred_region
          _
        $region24: #{transformer_block.1} parent=11 // pred_fallthru
          _
        // Predicated region
        $region25: #{transformer_block.1} parent=11 // pred_check
          %p328 = pneg %p131
        $region26: #{transformer_block.1} parent=11 // pred_check_branch
          %330 = sbr.rel (%p328) target = $region28
        $region27: #{transformer_block.1} parent=11 // pred_region
          _
        $region28: #{transformer_block.1} parent=11 // pred_fallthru
          _
        // Predicated region
        $region29: #{transformer_block.1} parent=11 // pred_check
          %p331 = pneg %p152
        $region30: #{transformer_block.1} parent=11 // pred_check_branch
          %333 = sbr.rel (%p331) target = $region32
        $region31: #{transformer_block.1} parent=11 // pred_region
          _
        $region32: #{transformer_block.1} parent=11 // pred_fallthru
          _
        // Predicated region
        $region33: #{transformer_block.1} parent=11 // pred_check
          %p334 = pneg %p173
        $region34: #{transformer_block.1} parent=11 // pred_check_branch
          %336 = sbr.rel (%p334) target = $region36
        $region35: #{transformer_block.1} parent=11 // pred_region
          _
        $region36: #{transformer_block.1} parent=11 // pred_fallthru
          _
        // Predicated region
        $region37: #{transformer_block.1} parent=11 // pred_check
          %p337 = pneg %p194
        $region38: #{transformer_block.1} parent=11 // pred_check_branch
          %339 = sbr.rel (%p337) target = $region40
        $region39: #{transformer_block.1} parent=11 // pred_region
          _
        $region40: #{transformer_block.1} parent=11 // pred_fallthru
          _
        // Predicated region
        $region41: #{transformer_block.1} parent=11 // pred_check
          %p340 = pneg %p215
        $region42: #{transformer_block.1} parent=11 // pred_check_branch
          %342 = sbr.rel (%p340) target = $region44
        $region43: #{transformer_block.1} parent=11 // pred_region
          _
        $region44: #{transformer_block.1} parent=11 // pred_fallthru
          _
        // Predicated region
        $region45: #{transformer_block.1} parent=11 // pred_check
          %p343 = pneg %p236
        $region46: #{transformer_block.1} parent=11 // pred_check_branch
          %345 = sbr.rel (%p343) target = $region48
        $region47: #{transformer_block.1} parent=11 // pred_region
          _
        $region48: #{transformer_block.1} parent=11 // pred_fallthru
          _
        // Predicated region
        $region49: #{transformer_block.1} parent=11 // pred_check
          %p346 = pneg %p257
        $region50: #{transformer_block.1} parent=11 // pred_check_branch
          %348 = sbr.rel (%p346) target = $region52
        $region51: #{transformer_block.1} parent=11 // pred_region
          _
        $region52: #{transformer_block.1} parent=11 // pred_fallthru
          _
        // Predicated region
        $region53: #{transformer_block.1} parent=11 // pred_check
          %p349 = pneg %p278
        $region54: #{transformer_block.1} parent=11 // pred_check_branch
          %351 = sbr.rel (%p349) target = $region56
        $region55: #{transformer_block.1} parent=11 // pred_region
          _
        $region56: #{transformer_block.1} parent=11 // pred_fallthru
          _
      $region12: #{transformer_block.1} parent=5 // pred_fallthru
        _
      %p352 = scmp.lt.s32.totalorder %s21, 2
      // Predicated region
      $region57: #{transformer_block.1} parent=5 // pred_check
        %p353 = pneg %p352
      $region58: #{transformer_block.1} parent=5 // pred_check_branch
        %355 = sbr.rel (%p353) target = $region60
      $region59: #{transformer_block.1} parent=5 // pred_region
        // Predicated region
        $region61: #{transformer_block.1} parent=59 // pred_check
          %p356 = pneg %p41
        $region62: #{transformer_block.1} parent=59 // pred_check_branch
          %358 = sbr.rel (%p356) target = $region64
        $region63: #{transformer_block.1} parent=59 // pred_region
          %p359 = scmp.lt.s32.totalorder %s21, 1
          %s360 = scalar_select %p359, %s21, 1
          %s361 = smul.addr %s360, 8
          %s362 = scalar_lea.vmem %s0, %s361
        $region64: #{transformer_block.1} parent=59 // pred_fallthru
          _
      $region60: #{transformer_block.1} parent=5 // pred_fallthru
        _
      %p363 = scmp.le.s32.totalorder 1, %s21
      %p364 = scmp.lt.s32.totalorder %s21, 3
      %p365 = pnand %p363, %p364
      %p366 = pneg %p365
      // Predicated region
      $region65: #{transformer_block.1} parent=5 // pred_check
        _
      $region66: #{transformer_block.1} parent=5 // pred_check_branch
        %368 = sbr.rel (%p365) target = $region68
      $region67: #{transformer_block.1} parent=5 // pred_region
        %s369 = ssub.s32 %s21, 1
        %p370 = scmp.lt.s32.totalorder %s26, 1
        %s371 = scalar_select %p370, %s26, 1
        %s372 = smul.addr %s371, 8
        %s373 = scalar_lea.vmem %s0, %s372
        %p374 = pneg %p47
        %p375 = pneg %p44
        %p376 = pneg %p68
        %p377 = pneg %p65
        %p378 = pneg %p89
        %p379 = pneg %p86
        %p380 = pneg %p110
        %p381 = pneg %p107
        %p382 = pneg %p131
        %p383 = pneg %p128
        %p384 = pneg %p152
        %p385 = pneg %p149
        %p386 = pneg %p173
        %p387 = pneg %p170
        %p388 = pneg %p194
        %p389 = pneg %p191
        %p390 = pneg %p215
        %p391 = pneg %p212
        %p392 = pneg %p236
        %p393 = pneg %p233
        %p394 = pneg %p257
        %p395 = pneg %p254
        %p396 = pneg %p278
        %p397 = pneg %p275
        %p398 = pneg %p304
        %p399 = pneg %p301
        %s400 = sand.u32 %s291, 1
        %s401 = scalar_lea.sflag [#allocation3], %s400
        %s402 = sand.u32 %s291, 1
        %s403 = smul.addr %s402, 8
        %s404 = scalar_lea.vmem [#allocation2], %s403
        %p405 = scmp.lt.s32.totalorder %s26, 1
        %s406 = scalar_select %p405, %s26, 1
        %s407 = smul.addr %s406, 8
        %s408 = scalar_lea.vmem %s0, %s407
        %v409 = vld [vmem:[%s408] sm:$0xff]
        %v410 = vld [vmem:[%s1] sm:$0x1]
        %v411 = vld [vmem:[%s2] sm:$0x1]
        %vm412 = vcmask 261120
        %v413 = vsel %vm412, %v409, 0.0
        %414 = vadd.xlane.f32.xlu0 %v413
        %v415 = vpop.xlane.xlu0 %414
        %v416 = vrcp.pop 32.0
        %v417 = vmul.f32 32.0, %v416
        %v418 = vsub.f32 1.0, %v417
        %v419 = vmul.f32 %v416, %v418
        %v420 = vadd.f32 %v416, %v419
        %vm421 = vweird.f32 %v416
        %v422 = vsel %vm421, %v416, %v420
        %v423 = vmul.f32 %v415, %v422
        %v424 = vsub.f32 %v409, %v423
        %v425 = vmul.f32 %v424, %v424
        %v426 = vsel %vm412, %v425, 0.0
        %427 = vadd.xlane.f32.xlu0 %v426
        %v428 = vpop.xlane.xlu0 %427
        %v429 = vmul.f32 %v428, %v422
        %v430 = vadd.f32 %v429, 1e-05
        %v431 = vrsqrt.pop %v430
        %v432 = vmul.f32 %v431, %v430
        %v433 = vmul.f32 %v432, %v431
        %v434 = vmul.f32 0.5, %v433
        %v435 = vsub.f32 1.5, %v434
        %v436 = vmul.f32 %v431, %v435
        %vm437 = vweird.f32 %v430
        %vm438 = vweird.f32 %v431
        %vm439 = vmor %vm437, %vm438
        %v440 = vsel %vm439, %v431, %v436
        %v441 = vmul.f32 %v424, %v440
        %v443 = vperm.slane %v410, 0
        %v445 = vmul.f32 %v441, %v443
        %v447 = vperm.slane %v411, 0
        %v449 = vadd.f32 %v445, %v447
        %v450 = vld [vmem:[%s3] sm:$0xff]
        %v451 = vld [vmem:[%s3 + $0x8] sm:$0xff]
        %v452 = vld [vmem:[%s3 + $0x10] sm:$0xff]
        %v453 = vld [vmem:[%s3 + $0x18] sm:$0xff]
        %v454 = vld [vmem:[%s3 + $0x20] sm:$0xff]
        %v455 = vld [vmem:[%s3 + $0x28] sm:$0xff]
        %v456 = vld [vmem:[%s3 + $0x30] sm:$0xff]
        %v457 = vld [vmem:[%s3 + $0x38] sm:$0xff]
        %v458 = vld [vmem:[%s3 + $0x40] sm:$0xff]
        %v459 = vld [vmem:[%s3 + $0x48] sm:$0xff]
        %v460 = vld [vmem:[%s3 + $0x50] sm:$0xff]
        %v461 = vld [vmem:[%s3 + $0x58] sm:$0xff]
        %v462 = vld [vmem:[%s3 + $0x60] sm:$0xff]
        %v463 = vld [vmem:[%s3 + $0x68] sm:$0xff]
        %v464 = vld [vmem:[%s3 + $0x70] sm:$0xff]
        %v465 = vld [vmem:[%s3 + $0x78] sm:$0xff]
        %v467 = vsel %vm412, %v449, 0
        %469 = vmatpush.msra.mxu0 0.0
        %470 = vmatpush.msra.mxu0 0.0
        %471 = vmatpush.msra.mxu0 0.0
        %472 = vmatpush.msra.mxu0 0.0
        %473 = vmatpush.msra.mxu0 0.0
        %474 = vmatpush.msra.mxu0 0.0
        %475 = vmatpush.msra.mxu0 0.0
        %476 = vmatpush.msra.mxu0 0.0
        %477 = vmatpush.msra.mxu0 0.0
        %478 = vmatpush.msra.mxu0 0.0
        %479 = vmatpush.msra.mxu0 0.0
        %480 = vmatpush.msra.mxu0 0.0
        %481 = vmatpush.msra.mxu0 %v453
        %482 = vmatpush.msra.mxu0 %v452
        %483 = vmatpush.msra.mxu0 %v451
        %484 = vmatpush.msra.mxu0 %v450
        %485 = vmatmul.f32.gmra.mxu0 %v467
        %v486 = vpop.f32.mrf.mxu0
        %v487 = vadd.f32 0.0, %v486
        %488 = vdwg.mxu0
        %489 = vmatpush.msra.mxu0 0.0
        %490 = vmatpush.msra.mxu0 0.0
        %491 = vmatpush.msra.mxu0 0.0
        %492 = vmatpush.msra.mxu0 0.0
        %493 = vmatpush.msra.mxu0 0.0
        %494 = vmatpush.msra.mxu0 0.0
        %495 = vmatpush.msra.mxu0 0.0
        %496 = vmatpush.msra.mxu0 0.0
        %497 = vmatpush.msra.mxu0 0.0
        %498 = vmatpush.msra.mxu0 0.0
        %499 = vmatpush.msra.mxu0 0.0
        %500 = vmatpush.msra.mxu0 0.0
        %501 = vmatpush.msra.mxu0 %v457
        %502 = vmatpush.msra.mxu0 %v456
        %503 = vmatpush.msra.mxu0 %v455
        %504 = vmatpush.msra.mxu0 %v454
        %505 = vmatmul.f32.gmra.mxu0 %v467
        %v506 = vpop.f32.mrf.mxu0
        %v507 = vadd.f32 0.0, %v506
        %508 = vdwg.mxu0
        %509 = vmatpush.msra.mxu0 0.0
        %510 = vmatpush.msra.mxu0 0.0
        %511 = vmatpush.msra.mxu0 0.0
        %512 = vmatpush.msra.mxu0 0.0
        %513 = vmatpush.msra.mxu0 0.0
        %514 = vmatpush.msra.mxu0 0.0
        %515 = vmatpush.msra.mxu0 0.0
        %516 = vmatpush.msra.mxu0 0.0
        %517 = vmatpush.msra.mxu0 0.0
        %518 = vmatpush.msra.mxu0 0.0
        %519 = vmatpush.msra.mxu0 0.0
        %520 = vmatpush.msra.mxu0 0.0
        %521 = vmatpush.msra.mxu0 %v461
        %522 = vmatpush.msra.mxu0 %v460
        %523 = vmatpush.msra.mxu0 %v459
        %524 = vmatpush.msra.mxu0 %v458
        %525 = vmatmul.f32.gmra.mxu0 %v467
        %v526 = vpop.f32.mrf.mxu0
        %v527 = vadd.f32 0.0, %v526
        %528 = vdwg.mxu0
        %529 = vmatpush.msra.mxu0 0.0
        %530 = vmatpush.msra.mxu0 0.0
        %531 = vmatpush.msra.mxu0 0.0
        %532 = vmatpush.msra.mxu0 0.0
        %533 = vmatpush.msra.mxu0 0.0
        %534 = vmatpush.msra.mxu0 0.0
        %535 = vmatpush.msra.mxu0 0.0
        %536 = vmatpush.msra.mxu0 0.0
        %537 = vmatpush.msra.mxu0 0.0
        %538 = vmatpush.msra.mxu0 0.0
        %539 = vmatpush.msra.mxu0 0.0
        %540 = vmatpush.msra.mxu0 0.0
        %541 = vmatpush.msra.mxu0 %v465
        %542 = vmatpush.msra.mxu0 %v464
        %543 = vmatpush.msra.mxu0 %v463
        %544 = vmatpush.msra.mxu0 %v462
        %545 = vmatmul.f32.gmra.mxu0 %v467
        %v546 = vpop.f32.mrf.mxu0
        %v547 = vadd.f32 0.0, %v546
        %548 = vdwg.mxu0
        %v549 = vmul.f32 %v487, 0.35355338
        %v550 = vmul.f32 %v507, 0.35355338
        %v551 = vmul.f32 %v527, 0.35355338
        %v552 = vmul.f32 %v547, 0.35355338
        %554 = vrot.lane.b32.xlu0 %v487, 120
        %v555 = vpop.permute.xlu0 %554
        %vm556 = vcmask 64512
        %v558 = vsel %vm556, %v549, 0
        %v560 = vsel %vm556, %v555, 0
        %562 = vmatpush.xpose.msra.mxu0 0.0
        %563 = vmatpush.xpose.msra.mxu0 0.0
        %564 = vmatpush.xpose.msra.mxu0 0.0
        %565 = vmatpush.xpose.msra.mxu0 0.0
        %566 = vmatpush.xpose.msra.mxu0 0.0
        %567 = vmatpush.xpose.msra.mxu0 0.0
        %568 = vmatpush.xpose.msra.mxu0 0.0
        %569 = vmatpush.xpose.msra.mxu0 0.0
        %570 = vmatpush.xpose.msra.mxu0 0.0
        %571 = vmatpush.xpose.msra.mxu0 0.0
        %572 = vmatpush.xpose.msra.mxu0 0.0
        %573 = vmatpush.xpose.msra.mxu0 0.0
        %574 = vmatpush.xpose.msra.mxu0 0.0
        %575 = vmatpush.xpose.msra.mxu0 0.0
        %576 = vmatpush.xpose.msra.mxu0 0.0
        %577 = vmatpush.xpose.msra.mxu0 %v560
        %578 = vmatmul.f32.gmra.mxu0 %v558
        %v579 = vpop.f32.mrf.mxu0
        %v580 = vadd.f32 0.0, %v579
        %581 = vdwg.mxu0
        %583 = vrot.lane.b32.xlu0 %v507, 120
        %v584 = vpop.permute.xlu0 %583
        %v586 = vsel %vm556, %v550, 0
        %v588 = vsel %vm556, %v584, 0
        %590 = vmatpush.xpose.msra.mxu0 0.0
        %591 = vmatpush.xpose.msra.mxu0 0.0
        %592 = vmatpush.xpose.msra.mxu0 0.0
        %593 = vmatpush.xpose.msra.mxu0 0.0
        %594 = vmatpush.xpose.msra.mxu0 0.0
        %595 = vmatpush.xpose.msra.mxu0 0.0
        %596 = vmatpush.xpose.msra.mxu0 0.0
        %597 = vmatpush.xpose.msra.mxu0 0.0
        %598 = vmatpush.xpose.msra.mxu0 0.0
        %599 = vmatpush.xpose.msra.mxu0 0.0
        %600 = vmatpush.xpose.msra.mxu0 0.0
        %601 = vmatpush.xpose.msra.mxu0 0.0
        %602 = vmatpush.xpose.msra.mxu0 0.0
        %603 = vmatpush.xpose.msra.mxu0 0.0
        %604 = vmatpush.xpose.msra.mxu0 0.0
        %605 = vmatpush.xpose.msra.mxu0 %v588
        %606 = vmatmul.f32.gmra.mxu0 %v586
        %v607 = vpop.f32.mrf.mxu0
        %v608 = vadd.f32 0.0, %v607
        %609 = vdwg.mxu0
        %611 = vrot.lane.b32.xlu0 %v527, 120
        %v612 = vpop.permute.xlu0 %611
        %v614 = vsel %vm556, %v551, 0
        %v616 = vsel %vm556, %v612, 0
        %618 = vmatpush.xpose.msra.mxu0 0.0
        %619 = vmatpush.xpose.msra.mxu0 0.0
        %620 = vmatpush.xpose.msra.mxu0 0.0
        %621 = vmatpush.xpose.msra.mxu0 0.0
        %622 = vmatpush.xpose.msra.mxu0 0.0
        %623 = vmatpush.xpose.msra.mxu0 0.0
        %624 = vmatpush.xpose.msra.mxu0 0.0
        %625 = vmatpush.xpose.msra.mxu0 0.0
        %626 = vmatpush.xpose.msra.mxu0 0.0
        %627 = vmatpush.xpose.msra.mxu0 0.0
        %628 = vmatpush.xpose.msra.mxu0 0.0
        %629 = vmatpush.xpose.msra.mxu0 0.0
        %630 = vmatpush.xpose.msra.mxu0 0.0
        %631 = vmatpush.xpose.msra.mxu0 0.0
        %632 = vmatpush.xpose.msra.mxu0 0.0
        %633 = vmatpush.xpose.msra.mxu0 %v616
        %634 = vmatmul.f32.gmra.mxu0 %v614
        %v635 = vpop.f32.mrf.mxu0
        %v636 = vadd.f32 0.0, %v635
        %637 = vdwg.mxu0
        %639 = vrot.lane.b32.xlu0 %v547, 120
        %v640 = vpop.permute.xlu0 %639
        %v642 = vsel %vm556, %v552, 0
        %v644 = vsel %vm556, %v640, 0
        %646 = vmatpush.xpose.msra.mxu0 0.0
        %647 = vmatpush.xpose.msra.mxu0 0.0
        %648 = vmatpush.xpose.msra.mxu0 0.0
        %649 = vmatpush.xpose.msra.mxu0 0.0
        %650 = vmatpush.xpose.msra.mxu0 0.0
        %651 = vmatpush.xpose.msra.mxu0 0.0
        %652 = vmatpush.xpose.msra.mxu0 0.0
        %653 = vmatpush.xpose.msra.mxu0 0.0
        %654 = vmatpush.xpose.msra.mxu0 0.0
        %655 = vmatpush.xpose.msra.mxu0 0.0
        %656 = vmatpush.xpose.msra.mxu0 0.0
        %657 = vmatpush.xpose.msra.mxu0 0.0
        %658 = vmatpush.xpose.msra.mxu0 0.0
        %659 = vmatpush.xpose.msra.mxu0 0.0
        %660 = vmatpush.xpose.msra.mxu0 0.0
        %661 = vmatpush.xpose.msra.mxu0 %v644
        %662 = vmatmul.f32.gmra.mxu0 %v642
        %v663 = vpop.f32.mrf.mxu0
        %v664 = vadd.f32 0.0, %v663
        %665 = vdwg.mxu0
        %v666 = vlaneseq
        %v667 = vshrl.u32 %v666, 7
        %v668 = vlaneseq
        %v669 = vand.u32 %v668, 127
        %vm670 = vcmp.ge.s32.totalorder %v667, %v669
        %v671 = vsel %vm670, 1, 0
        %vm672 = vcmp.eq.s32.totalorder %v671, 1
        %v673 = vsel %vm672, %v580, -1e+30
        %v674 = vsel %vm672, %v608, -1e+30
        %v675 = vsel %vm672, %v636, -1e+30
        %v676 = vsel %vm672, %v664, -1e+30
        %v677 = vsel %vm556, %v673, -inf
        %678 = vmax.xlane.f32.xlu0 %v677
        %v679 = vpop.xlane.xlu0 %678
        %v680 = vsel %vm556, %v674, -inf
        %681 = vmax.xlane.f32.xlu0 %v680
        %v682 = vpop.xlane.xlu0 %681
        %v683 = vsel %vm556, %v675, -inf
        %684 = vmax.xlane.f32.xlu0 %v683
        %v685 = vpop.xlane.xlu0 %684
        %v686 = vsel %vm556, %v676, -inf
        %687 = vmax.xlane.f32.xlu0 %v686
        %v688 = vpop.xlane.xlu0 %687
        %v689 = vsub.f32 %v673, %v679
        %v690 = vsub.f32 %v674, %v682
        %v691 = vsub.f32 %v675, %v685
        %v692 = vsub.f32 %v676, %v688
        %v693 = vmul.f32 %v689, 1.442695
        %v694 = vpow.pop %v693
        %v695 = vmul.f32 %v690, 1.442695
        %v696 = vpow.pop %v695
        %v697 = vmul.f32 %v691, 1.442695
        %v698 = vpow.pop %v697
        %v699 = vmul.f32 %v692, 1.442695
        %v700 = vpow.pop %v699
        %v701 = vsel %vm556, %v694, 0.0
        %702 = vadd.xlane.f32.xlu0 %v701
        %v703 = vpop.xlane.xlu0 %702
        %v704 = vsel %vm556, %v696, 0.0
        %705 = vadd.xlane.f32.xlu0 %v704
        %v706 = vpop.xlane.xlu0 %705
        %v707 = vsel %vm556, %v698, 0.0
        %708 = vadd.xlane.f32.xlu0 %v707
        %v709 = vpop.xlane.xlu0 %708
        %v710 = vsel %vm556, %v700, 0.0
        %711 = vadd.xlane.f32.xlu0 %v710
        %v712 = vpop.xlane.xlu0 %711
        %713 = vrot.lane.b32.xlu0 %v487, 112
        %v714 = vpop.permute.xlu0 %713
        %v717 = vsel %vm556, %v694, 0
        %719 = vmatpush.msra.mxu0 0.0
        %720 = vmatpush.msra.mxu0 0.0
        %721 = vmatpush.msra.mxu0 0.0
        %722 = vmatpush.msra.mxu0 0.0
        %723 = vmatpush.msra.mxu0 0.0
        %724 = vmatpush.msra.mxu0 0.0
        %725 = vmatpush.msra.mxu0 0.0
        %726 = vmatpush.msra.mxu0 0.0
        %727 = vmatpush.msra.mxu0 0.0
        %728 = vmatpush.msra.mxu0 0.0
        %729 = vmatpush.msra.mxu0 0.0
        %730 = vmatpush.msra.mxu0 0.0
        %731 = vmatpush.msra.mxu0 0.0
        %732 = vmatpush.msra.mxu0 0.0
        %733 = vmatpush.msra.mxu0 0.0
        %734 = vmatpush.msra.mxu0 %v714
        %735 = vmatmul.f32.gmra.mxu0 %v717
        %v736 = vpop.f32.mrf.mxu0
        %v737 = vadd.f32 0.0, %v736
        %738 = vdwg.mxu0
        %739 = vrot.lane.b32.xlu0 %v507, 112
        %v740 = vpop.permute.xlu0 %739
        %v743 = vsel %vm556, %v696, 0
        %745 = vmatpush.msra.mxu0 0.0
        %746 = vmatpush.msra.mxu0 0.0
        %747 = vmatpush.msra.mxu0 0.0
        %748 = vmatpush.msra.mxu0 0.0
        %749 = vmatpush.msra.mxu0 0.0
        %750 = vmatpush.msra.mxu0 0.0
        %751 = vmatpush.msra.mxu0 0.0
        %752 = vmatpush.msra.mxu0 0.0
        %753 = vmatpush.msra.mxu0 0.0
        %754 = vmatpush.msra.mxu0 0.0
        %755 = vmatpush.msra.mxu0 0.0
        %756 = vmatpush.msra.mxu0 0.0
        %757 = vmatpush.msra.mxu0 0.0
        %758 = vmatpush.msra.mxu0 0.0
        %759 = vmatpush.msra.mxu0 0.0
        %760 = vmatpush.msra.mxu0 %v740
        %761 = vmatmul.f32.gmra.mxu0 %v743
        %v762 = vpop.f32.mrf.mxu0
        %v763 = vadd.f32 0.0, %v762
        %764 = vdwg.mxu0
        %765 = vrot.lane.b32.xlu0 %v527, 112
        %v766 = vpop.permute.xlu0 %765
        %v769 = vsel %vm556, %v698, 0
        %771 = vmatpush.msra.mxu0 0.0
        %772 = vmatpush.msra.mxu0 0.0
        %773 = vmatpush.msra.mxu0 0.0
        %774 = vmatpush.msra.mxu0 0.0
        %775 = vmatpush.msra.mxu0 0.0
        %776 = vmatpush.msra.mxu0 0.0
        %777 = vmatpush.msra.mxu0 0.0
        %778 = vmatpush.msra.mxu0 0.0
        %779 = vmatpush.msra.mxu0 0.0
        %780 = vmatpush.msra.mxu0 0.0
        %781 = vmatpush.msra.mxu0 0.0
        %782 = vmatpush.msra.mxu0 0.0
        %783 = vmatpush.msra.mxu0 0.0
        %784 = vmatpush.msra.mxu0 0.0
        %785 = vmatpush.msra.mxu0 0.0
        %786 = vmatpush.msra.mxu0 %v766
        %787 = vmatmul.f32.gmra.mxu0 %v769
        %v788 = vpop.f32.mrf.mxu0
        %v789 = vadd.f32 0.0, %v788
        %790 = vdwg.mxu0
        %791 = vrot.lane.b32.xlu0 %v547, 112
        %v792 = vpop.permute.xlu0 %791
        %v795 = vsel %vm556, %v700, 0
        %797 = vmatpush.msra.mxu0 0.0
        %798 = vmatpush.msra.mxu0 0.0
        %799 = vmatpush.msra.mxu0 0.0
        %800 = vmatpush.msra.mxu0 0.0
        %801 = vmatpush.msra.mxu0 0.0
        %802 = vmatpush.msra.mxu0 0.0
        %803 = vmatpush.msra.mxu0 0.0
        %804 = vmatpush.msra.mxu0 0.0
        %805 = vmatpush.msra.mxu0 0.0
        %806 = vmatpush.msra.mxu0 0.0
        %807 = vmatpush.msra.mxu0 0.0
        %808 = vmatpush.msra.mxu0 0.0
        %809 = vmatpush.msra.mxu0 0.0
        %810 = vmatpush.msra.mxu0 0.0
        %811 = vmatpush.msra.mxu0 0.0
        %812 = vmatpush.msra.mxu0 %v792
        %813 = vmatmul.f32.gmra.mxu0 %v795
        %v814 = vpop.f32.mrf.mxu0
        %v815 = vadd.f32 0.0, %v814
        %816 = vdwg.mxu0
        %v817 = vrcp.pop %v703
        %v818 = vmul.f32 %v703, %v817
        %v819 = vsub.f32 1.0, %v818
        %v820 = vmul.f32 %v817, %v819
        %v821 = vadd.f32 %v817, %v820
        %vm822 = vweird.f32 %v703
        %vm823 = vweird.f32 %v817
        %vm824 = vmor %vm822, %vm823
        %v825 = vsel %vm824, %v817, %v821
        %v826 = vand.u32 2147483647, %v703
        %vm827 = vcmp.eq.f32.partialorder %v826, 8.507059e+37
        %v828 = vand.u32 %v703, 2147483648
        %v829 = vor.u32 1.1754944e-38, %v828
        %v830 = vsel %vm827, %v829, %v825
        %v831 = vrcp.pop %v706
        %v832 = vmul.f32 %v706, %v831
        %v833 = vsub.f32 1.0, %v832
        %v834 = vmul.f32 %v831, %v833
        %v835 = vadd.f32 %v831, %v834
        %vm836 = vweird.f32 %v706
        %vm837 = vweird.f32 %v831
        %vm838 = vmor %vm836, %vm837
        %v839 = vsel %vm838, %v831, %v835
        %v840 = vand.u32 2147483647, %v706
        %vm841 = vcmp.eq.f32.partialorder %v840, 8.507059e+37
        %v842 = vand.u32 %v706, 2147483648
        %v843 = vor.u32 1.1754944e-38, %v842
        %v844 = vsel %vm841, %v843, %v839
        %v845 = vrcp.pop %v709
        %v846 = vmul.f32 %v709, %v845
        %v847 = vsub.f32 1.0, %v846
        %v848 = vmul.f32 %v845, %v847
        %v849 = vadd.f32 %v845, %v848
        %vm850 = vweird.f32 %v709
        %vm851 = vweird.f32 %v845
        %vm852 = vmor %vm850, %vm851
        %v853 = vsel %vm852, %v845, %v849
        %v854 = vand.u32 2147483647, %v709
        %vm855 = vcmp.eq.f32.partialorder %v854, 8.507059e+37
        %v856 = vand.u32 %v709, 2147483648
        %v857 = vor.u32 1.1754944e-38, %v856
        %v858 = vsel %vm855, %v857, %v853
        %v859 = vrcp.pop %v712
        %v860 = vmul.f32 %v712, %v859
        %v861 = vsub.f32 1.0, %v860
        %v862 = vmul.f32 %v859, %v861
        %v863 = vadd.f32 %v859, %v862
        %vm864 = vweird.f32 %v712
        %vm865 = vweird.f32 %v859
        %vm866 = vmor %vm864, %vm865
        %v867 = vsel %vm866, %v859, %v863
        %v868 = vand.u32 2147483647, %v712
        %vm869 = vcmp.eq.f32.partialorder %v868, 8.507059e+37
        %v870 = vand.u32 %v712, 2147483648
        %v871 = vor.u32 1.1754944e-38, %v870
        %v872 = vsel %vm869, %v871, %v867
        %v873 = vmul.f32 %v737, %v830
        %v874 = vmul.f32 %v763, %v844
        %v875 = vmul.f32 %v789, %v858
        %v876 = vmul.f32 %v815, %v872
        %v877 = vld [vmem:[%s4] sm:$0xff]
        %v878 = vld [vmem:[%s4 + $0x8] sm:$0xff]
        %v879 = vld [vmem:[%s4 + $0x10] sm:$0xff]
        %v880 = vld [vmem:[%s4 + $0x18] sm:$0xff]
        %v882 = vsel %vm556, %v873, 0
        %884 = vmatpush.msra.mxu0 0.0
        %885 = vmatpush.msra.mxu0 0.0
        %886 = vmatpush.msra.mxu0 0.0
        %887 = vmatpush.msra.mxu0 0.0
        %888 = vmatpush.msra.mxu0 0.0
        %889 = vmatpush.msra.mxu0 0.0
        %890 = vmatpush.msra.mxu0 0.0
        %891 = vmatpush.msra.mxu0 0.0
        %892 = vmatpush.msra.mxu0 0.0
        %893 = vmatpush.msra.mxu0 0.0
        %894 = vmatpush.msra.mxu0 0.0
        %895 = vmatpush.msra.mxu0 0.0
        %896 = vmatpush.msra.mxu0 0.0
        %897 = vmatpush.msra.mxu0 0.0
        %898 = vmatpush.msra.mxu0 0.0
        %899 = vmatpush.msra.mxu0 %v877
        %900 = vmatmul.f32.gmra.mxu0 %v882
        %v901 = vpop.f32.mrf.mxu0
        %v902 = vadd.f32 0.0, %v901
        %903 = vdwg.mxu0
        %v905 = vsel %vm556, %v874, 0
        %907 = vmatpush.msra.mxu0 0.0
        %908 = vmatpush.msra.mxu0 0.0
        %909 = vmatpush.msra.mxu0 0.0
        %910 = vmatpush.msra.mxu0 0.0
        %911 = vmatpush.msra.mxu0 0.0
        %912 = vmatpush.msra.mxu0 0.0
        %913 = vmatpush.msra.mxu0 0.0
        %914 = vmatpush.msra.mxu0 0.0
        %915 = vmatpush.msra.mxu0 0.0
        %916 = vmatpush.msra.mxu0 0.0
        %917 = vmatpush.msra.mxu0 0.0
        %918 = vmatpush.msra.mxu0 0.0
        %919 = vmatpush.msra.mxu0 0.0
        %920 = vmatpush.msra.mxu0 0.0
        %921 = vmatpush.msra.mxu0 0.0
        %922 = vmatpush.msra.mxu0 %v878
        %923 = vmatmul.f32.gmra.mxu0 %v905
        %v924 = vpop.f32.mrf.mxu0
        %v925 = vadd.f32 0.0, %v924
        %926 = vdwg.mxu0
        %v928 = vsel %vm556, %v875, 0
        %930 = vmatpush.msra.mxu0 0.0
        %931 = vmatpush.msra.mxu0 0.0
        %932 = vmatpush.msra.mxu0 0.0
        %933 = vmatpush.msra.mxu0 0.0
        %934 = vmatpush.msra.mxu0 0.0
        %935 = vmatpush.msra.mxu0 0.0
        %936 = vmatpush.msra.mxu0 0.0
        %937 = vmatpush.msra.mxu0 0.0
        %938 = vmatpush.msra.mxu0 0.0
        %939 = vmatpush.msra.mxu0 0.0
        %940 = vmatpush.msra.mxu0 0.0
        %941 = vmatpush.msra.mxu0 0.0
        %942 = vmatpush.msra.mxu0 0.0
        %943 = vmatpush.msra.mxu0 0.0
        %944 = vmatpush.msra.mxu0 0.0
        %945 = vmatpush.msra.mxu0 %v879
        %946 = vmatmul.f32.gmra.mxu0 %v928
        %v947 = vpop.f32.mrf.mxu0
        %v948 = vadd.f32 0.0, %v947
        %949 = vdwg.mxu0
        %v951 = vsel %vm556, %v876, 0
        %953 = vmatpush.msra.mxu0 0.0
        %954 = vmatpush.msra.mxu0 0.0
        %955 = vmatpush.msra.mxu0 0.0
        %956 = vmatpush.msra.mxu0 0.0
        %957 = vmatpush.msra.mxu0 0.0
        %958 = vmatpush.msra.mxu0 0.0
        %959 = vmatpush.msra.mxu0 0.0
        %960 = vmatpush.msra.mxu0 0.0
        %961 = vmatpush.msra.mxu0 0.0
        %962 = vmatpush.msra.mxu0 0.0
        %963 = vmatpush.msra.mxu0 0.0
        %964 = vmatpush.msra.mxu0 0.0
        %965 = vmatpush.msra.mxu0 0.0
        %966 = vmatpush.msra.mxu0 0.0
        %967 = vmatpush.msra.mxu0 0.0
        %968 = vmatpush.msra.mxu0 %v880
        %969 = vmatmul.f32.gmra.mxu0 %v951
        %v970 = vpop.f32.mrf.mxu0
        %v971 = vadd.f32 0.0, %v970
        %972 = vdwg.mxu0
        %v973 = vsel %vm412, %v902, 0.0
        %v974 = vsel %vm412, %v925, 0.0
        %v975 = vadd.f32 %v973, %v974
        %v976 = vsel %vm412, %v948, 0.0
        %v977 = vadd.f32 %v975, %v976
        %v978 = vsel %vm412, %v971, 0.0
        %v979 = vadd.f32 %v977, %v978
        %v980 = vld [vmem:[%s5] sm:$0x1]
        %v982 = vperm.slane %v980, 0
        %v984 = vadd.f32 %v979, %v982
        %v985 = vadd.f32 %v984, %v409
        %v986 = vld [vmem:[%s6] sm:$0x1]
        %v987 = vld [vmem:[%s7] sm:$0x1]
        %v988 = vsel %vm412, %v985, 0.0
        %989 = vadd.xlane.f32.xlu0 %v988
        %v990 = vpop.xlane.xlu0 %989
        %v991 = vmul.f32 %v990, %v422
        %v992 = vsub.f32 %v985, %v991
        %v993 = vmul.f32 %v992, %v992
        %v994 = vsel %vm412, %v993, 0.0
        %995 = vadd.xlane.f32.xlu0 %v994
        %v996 = vpop.xlane.xlu0 %995
        %v997 = vmul.f32 %v996, %v422
        %v998 = vadd.f32 %v997, 1e-05
        %v999 = vrsqrt.pop %v998
        %v1000 = vmul.f32 %v999, %v998
        %v1001 = vmul.f32 %v1000, %v999
        %v1002 = vmul.f32 0.5, %v1001
        %v1003 = vsub.f32 1.5, %v1002
        %v1004 = vmul.f32 %v999, %v1003
        %vm1005 = vweird.f32 %v998
        %vm1006 = vweird.f32 %v999
        %vm1007 = vmor %vm1005, %vm1006
        %v1008 = vsel %vm1007, %v999, %v1004
        %v1009 = vmul.f32 %v992, %v1008
        %v1011 = vperm.slane %v986, 0
        %v1013 = vmul.f32 %v1009, %v1011
        %v1015 = vperm.slane %v987, 0
        %v1017 = vadd.f32 %v1013, %v1015
        %v1018 = vld [vmem:[%s8] sm:$0xff]
        %v1019 = vld [vmem:[%s8 + $0x8] sm:$0xff]
        %v1020 = vld [vmem:[%s8 + $0x10] sm:$0xff]
        %v1021 = vld [vmem:[%s8 + $0x18] sm:$0xff]
        %v1022 = vld [vmem:[%s9] sm:$0x1]
        %v1024 = vperm.slane %v1022, 0
        %v1027 = vsel %vm412, %v1017, 0
        %1029 = vmatpush.msra.mxu0 0.0
        %1030 = vmatpush.msra.mxu0 0.0
        %1031 = vmatpush.msra.mxu0 0.0
        %1032 = vmatpush.msra.mxu0 0.0
        %1033 = vmatpush.msra.mxu0 0.0
        %1034 = vmatpush.msra.mxu0 0.0
        %1035 = vmatpush.msra.mxu0 0.0
        %1036 = vmatpush.msra.mxu0 0.0
        %1037 = vmatpush.msra.mxu0 0.0
        %1038 = vmatpush.msra.mxu0 0.0
        %1039 = vmatpush.msra.mxu0 0.0
        %1040 = vmatpush.msra.mxu0 0.0
        %1041 = vmatpush.msra.mxu0 %v1021
        %1042 = vmatpush.msra.mxu0 %v1020
        %1043 = vmatpush.msra.mxu0 %v1019
        %1044 = vmatpush.msra.mxu0 %v1018
        %1045 = vmatmul.f32.gmra.mxu0 %v1027
        %v1046 = vpop.f32.mrf.mxu0
        %v1047 = vadd.f32 %v1024, %v1046
        %1048 = vdwg.mxu0
        %v1049 = vmax.f32 %v1047, 0.0
        %v1050 = vld [vmem:[%s10] sm:$0xff]
        %v1051 = vld [vmem:[%s10 + $0x8] sm:$0xff]
        %v1052 = vld [vmem:[%s10 + $0x10] sm:$0xff]
        %v1053 = vld [vmem:[%s10 + $0x18] sm:$0xff]
        %v1054 = vld [vmem:[%s10 + $0x20] sm:$0xff]
        %v1055 = vld [vmem:[%s10 + $0x28] sm:$0xff]
        %v1056 = vld [vmem:[%s10 + $0x30] sm:$0xff]
        %v1057 = vld [vmem:[%s10 + $0x38] sm:$0xff]
        %v1058 = vld [vmem:[%s10 + $0x40] sm:$0xff]
        %v1059 = vld [vmem:[%s10 + $0x48] sm:$0xff]
        %v1060 = vld [vmem:[%s10 + $0x50] sm:$0xff]
        %v1061 = vld [vmem:[%s10 + $0x58] sm:$0xff]
        %v1062 = vld [vmem:[%s10 + $0x60] sm:$0xff]
        %v1063 = vld [vmem:[%s10 + $0x68] sm:$0xff]
        %v1064 = vld [vmem:[%s10 + $0x70] sm:$0xff]
        %v1065 = vld [vmem:[%s10 + $0x78] sm:$0xff]
        %v1066 = vld [vmem:[%s11] sm:$0x1]
        %v1068 = vperm.slane %v1066, 0
        %1070 = vmatpush.msra.mxu0 %v1065
        %1071 = vmatpush.msra.mxu0 %v1064
        %1072 = vmatpush.msra.mxu0 %v1063
        %1073 = vmatpush.msra.mxu0 %v1062
        %1074 = vmatpush.msra.mxu0 %v1061
        %1075 = vmatpush.msra.mxu0 %v1060
        %1076 = vmatpush.msra.mxu0 %v1059
        %1077 = vmatpush.msra.mxu0 %v1058
        %1078 = vmatpush.msra.mxu0 %v1057
        %1079 = vmatpush.msra.mxu0 %v1056
        %1080 = vmatpush.msra.mxu0 %v1055
        %1081 = vmatpush.msra.mxu0 %v1054
        %1082 = vmatpush.msra.mxu0 %v1053
        %1083 = vmatpush.msra.mxu0 %v1052
        %1084 = vmatpush.msra.mxu0 %v1051
        %1085 = vmatpush.msra.mxu0 %v1050
        %1086 = vmatmul.f32.gmra.mxu0 %v1049
        %v1087 = vpop.f32.mrf.mxu0
        %v1088 = vadd.f32 %v1068, %v1087
        %1089 = vdwg.mxu0
        %v1090 = vadd.f32 %v1088, %v985
        %1091 = vst.msk [vmem:[%s404] sm:$0xff] %vm412, %v1090
        %s1092 = sand.u32 %s291, 1
        %s1093 = scalar_lea.sflag [#allocation3], %s1092
        %s1094 = sand.u32 %s291, 1
        %s1095 = smul.addr %s1094, 8
        %s1096 = scalar_lea.vmem [#allocation2], %s1095
        // Predicated region
        $region69: #{transformer_block.1} parent=67 // pred_check
          %p1097 = pneg %p301
        $region70: #{transformer_block.1} parent=67 // pred_check_branch
          %1099 = sbr.rel (%p1097) target = $region72
        $region71: #{transformer_block.1} parent=67 // pred_region
          %1101 = vsyncadd %s1093, 0
          %s1102 = smul.addr %s26, 8
          %s1103 = scalar_lea.hbm %s12, %s1102
          %s1105 = sshll.u32 %s1096, 4
          %s1106 = int_to_ptr.vmem [resolvable:$true] %s1105
          %s1107 = sshll.u32 %s1103, 4
          %s1108 = int_to_ptr.hbm [resolvable:$true] %s1107
          %1110 = dma.vmem_to_hbm [thread:$0]  %s1106, 128, %s1108, %s1093
        $region72: #{transformer_block.1} parent=67 // pred_fallthru
          _
      $region68: #{transformer_block.1} parent=5 // pred_fallthru
        _
      %p1111 = scmp.le.s32.totalorder 2, %s21
      // Predicated region
      $region73: #{transformer_block.1} parent=5 // pred_check
        %p1112 = pneg %p1111
      $region74: #{transformer_block.1} parent=5 // pred_check_branch
        %1114 = sbr.rel (%p1112) target = $region76
      $region75: #{transformer_block.1} parent=5 // pred_region
        %s1115 = ssub.s32 %s21, 2
        // Predicated region
        $region77: #{transformer_block.1} parent=75 // pred_check
          %p1116 = pneg %p307
        $region78: #{transformer_block.1} parent=75 // pred_check_branch
          %1118 = sbr.rel (%p1116) target = $region80
        $region79: #{transformer_block.1} parent=75 // pred_region
          %s1119 = sand.u32 %s292, 1
          %s1120 = scalar_lea.sflag [#allocation3], %s1119
          %s1121 = sand.u32 %s292, 1
          %s1122 = smul.addr %s1121, 8
          %s1123 = scalar_lea.vmem [#allocation2], %s1122
          %1125 = dma.done %s1120, 128
        $region80: #{transformer_block.1} parent=75 // pred_fallthru
          _
      $region76: #{transformer_block.1} parent=5 // pred_fallthru
        _
    $region6: #{transformer_block.1} parent=1 // loop_footer
      %s25 = sadd.s32 1, %s21
    $region7: #{transformer_block.1} parent=1 // loop_footer_branch
      %20 = sbr.rel target = $region3
    $region8: #{transformer_block.1} parent=1 // loop_exit
      _
    %1126 = vsyncpa [#allocation3], 1
    %s1127 = scalar_lea.sflag [#allocation3], 1
    %1128 = vsyncpa %s1127, 1

</llo_original>
